<compile_context>
chip_gen: v5e
topology: v5e:2x2
jax: 0.10.0
libtpu: 0.0.40
codegen_flags: <defaults>
</compile_context>

<pallas_src>
import functools

import jax
import jax.numpy as jnp
from jax.experimental import pallas as pl
from jax.experimental.pallas import tpu as pltpu

LANES = 128
SUBLANES = 8
MAX_TILE_ROWS = 8192      # (8192, 128) f32 = 4 MiB per stream per buffer


def _cdiv(a, b):
    return -(-a // b)


def _cores_per_device():
    """Grid shards along the 'parallel' axis: 1 on single-TC parts (v5e/v6e)."""
    try:
        kind = jax.devices()[0].device_kind.lower()
    except Exception:
        return 1
    if "lite" in kind or "v5e" in kind or "v6e" in kind:
        return 1
    return 2


def _bce_elem(x, t):
    """Elementwise PyTorch-style BCE (log terms clamped at -100)."""
    x = x.astype(jnp.float32)
    t = t.astype(jnp.float32)
    log_x = jnp.maximum(jnp.log(x), -100.0)
    log_1mx = jnp.maximum(jnp.log(1.0 - x), -100.0)
    return -(t * log_x + (1.0 - t) * log_1mx)


def _bce_kernel(x_ref, t_ref, out_ref, *, blocks_per_core, blocks_total, need_guard):
    c = pl.program_id(0)      # "parallel" shard (TensorCore on megacore parts)
    k = pl.program_id(1)      # "arbitrary" sequential reduction axis

    @pl.when(k == 0)
    def _init():
        out_ref[...] = jnp.zeros_like(out_ref)

    def _accumulate():
        # Inputs stream in their native dtype (e.g. bf16); upcast in-kernel.
        x = x_ref[...].astype(jnp.float32)
        t = t_ref[...].astype(jnp.float32)
        # TODO(synk): if targets are guaranteed hard 0/1, a single
        # log(where(t > 0.5, x, 1 - x)) would halve EUP work (matters on v5e).
        log_x = jnp.maximum(jnp.log(x), -100.0)
        log_1mx = jnp.maximum(jnp.log(1.0 - x), -100.0)
        loss = -(t * log_x + (1.0 - t) * log_1mx)
        # Fold the (tile_rows, 128) tile into one (8, 128) partial: pure VPU
        # adds, tiny accumulator RMW, no per-step cross-lane (XLU) reduction.
        out_ref[...] += loss.reshape(-1, SUBLANES, LANES).sum(axis=0)

    if need_guard:
        # Grid is padded up to ncores * blocks_per_core steps; skip the
        # (at most ncores - 1) steps whose tile lies beyond the bulk region.
        pl.when(c * blocks_per_core + k < blocks_total)(_accumulate)
    else:
        _accumulate()


def custom_loss(inputs, targets):
    """BCE(inputs, targets, reduction='mean') over all elements (PyTorch semantics)."""
    n = inputs.size
    x = inputs.reshape(-1)    # free bitcast-style reshape; keep native dtype
    t = targets.reshape(-1)

    # Rare: lane-align with exactly-zero-loss pad values (x=1, t=1 -> loss 0).
    if n % LANES != 0:
        pad = LANES - n % LANES
        x = jnp.concatenate([x, jnp.ones((pad,), x.dtype)])
        t = jnp.concatenate([t, jnp.ones((pad,), t.dtype)])
    rows = x.shape[0] // LANES
    x2 = x.reshape(rows, LANES)
    t2 = t.reshape(rows, LANES)

    # Rare: fewer than 8 rows (n < 1024) -> pad the tiny slab to 8 rows.
    if rows < SUBLANES:
        pad_r = SUBLANES - rows
        x2 = jnp.concatenate([x2, jnp.ones((pad_r, LANES), x2.dtype)], axis=0)
        t2 = jnp.concatenate([t2, jnp.ones((pad_r, LANES), t2.dtype)], axis=0)
        rows = SUBLANES

    # Kernel covers only whole tiles; leftover (< tile_rows) rows go to jnp.
    tile_rows = min(MAX_TILE_ROWS, (rows // SUBLANES) * SUBLANES)
    blocks = rows // tile_rows
    rows_bulk = blocks * tile_rows

    ncores = min(_cores_per_device(), blocks)
    blocks_per_core = _cdiv(blocks, ncores)
    need_guard = ncores * blocks_per_core != blocks

    bytes_per_elem = x2.dtype.itemsize + t2.dtype.itemsize
    cost = pl.CostEstimate(
        flops=8 * rows_bulk * LANES,
        transcendentals=2 * rows_bulk * LANES,
        bytes_accessed=rows_bulk * LANES * bytes_per_elem,
    )

    tile_spec = pl.BlockSpec((tile_rows, LANES),
                             lambda c, k: (c * blocks_per_core + k, 0))

    partials = pl.pallas_call(
        functools.partial(_bce_kernel,
                          blocks_per_core=blocks_per_core,
                          blocks_total=blocks,
                          need_guard=need_guard),
        out_shape=jax.ShapeDtypeStruct((ncores * SUBLANES, LANES), jnp.float32),
        grid=(ncores, blocks_per_core),
        in_specs=[tile_spec, tile_spec],
        out_specs=pl.BlockSpec((SUBLANES, LANES), lambda c, k: (c, 0)),
        compiler_params=pltpu.CompilerParams(
            dimension_semantics=("parallel", "arbitrary"),
            vmem_limit_bytes=32 * 1024 * 1024),
        cost_estimate=cost,
    )(x2, t2)

    total = jnp.sum(partials, dtype=jnp.float32)

    # Row remainder (< one tile): tiny slice, plain jnp in the wrapper.
    if rows_bulk < rows:
        total = total + jnp.sum(_bce_elem(x2[rows_bulk:], t2[rows_bulk:]))

    # Mean over the ORIGINAL element count (padded elements contribute 0).
    return total / jnp.float32(n)


def _reference(inputs, targets):
    return jnp.mean(_bce_elem(inputs.reshape(-1), targets.reshape(-1)))


if __name__ == "__main__":
    key = jax.random.PRNGKey(0)
    k1, k2 = jax.random.split(key)

    # Probabilities from a post-sigmoid 3D-UNet head; binary targets.
    inputs = jax.nn.sigmoid(jax.random.normal(k1, (2, 4, 16, 16), jnp.float32))
    targets = (jax.random.uniform(k2, (2, 4, 16, 16)) < 0.5).astype(jnp.float32)

    loss = custom_loss(inputs, targets)
    jax.block_until_ready(loss)

    ref = _reference(inputs, targets)
    assert jnp.allclose(loss, ref, rtol=1e-5, atol=1e-6), (loss, ref)

    print("KERNEL_OK")
</pallas_src>

<mosaic_0001>
module attributes {stable_mosaic.version = 11 : i64} {
  func.func @_bce_kernel(%arg0: i32, %arg1: i32, %arg2: memref<16x128xf32, #tpu.memory_space<vmem>>, %arg3: memref<16x128xf32, #tpu.memory_space<vmem>>, %arg4: memref<8x128xf32, #tpu.memory_space<vmem>>) attributes {dimension_semantics = [#tpu.dimension_semantics<parallel>, #tpu.dimension_semantics<arbitrary>], iteration_bounds = array<i64: 1, 1>, scalar_prefetch = 0 : i64, scratch_operands = 0 : i64, tpu.core_type = #tpu.core_type<tc>, window_params = [{transform_indices = @transform_0, window_bounds = array<i64: 16, 128>}, {transform_indices = @transform_1, window_bounds = array<i64: 16, 128>}, {transform_indices = @transform_2, window_bounds = array<i64: 8, 128>}]} {
    %c0_i32 = arith.constant 0 : i32
    %0 = arith.cmpi eq, %arg1, %c0_i32 : i32
    %1 = arith.extui %0 : i1 to i32
    %c0_i32_0 = arith.constant 0 : i32
    %2 = arith.cmpi ne, %1, %c0_i32_0 : i32
    scf.if %2 {
      %cst_13 = arith.constant 0.000000e+00 : f32
      %25 = vector.broadcast %cst_13 : f32 to vector<8x128xf32>
      %c0_14 = arith.constant 0 : index
      %c0_15 = arith.constant 0 : index
      %26 = vector.load %arg4[%c0_14, %c0_15] : memref<8x128xf32, #tpu.memory_space<vmem>>, vector<8x128xf32>
      tpu.vector_store %arg4[%c0_14, %c0_15], %25 {strides = array<i32>} : memref<8x128xf32, #tpu.memory_space<vmem>>, vector<8x128xf32>,
    } else {
    }
    %c0 = arith.constant 0 : index
    %c0_1 = arith.constant 0 : index
    %3 = vector.load %arg2[%c0, %c0_1] : memref<16x128xf32, #tpu.memory_space<vmem>>, vector<16x128xf32>
    %c0_2 = arith.constant 0 : index
    %c0_3 = arith.constant 0 : index
    %4 = vector.load %arg3[%c0_2, %c0_3] : memref<16x128xf32, #tpu.memory_space<vmem>>, vector<16x128xf32>
    %5 = math.log %3 : vector<16x128xf32>
    %cst = arith.constant -1.000000e+02 : f32
    %6 = vector.broadcast %cst : f32 to vector<16x128xf32>
    %7 = arith.maximumf %5, %6 : vector<16x128xf32>
    %cst_4 = arith.constant 1.000000e+00 : f32
    %8 = vector.broadcast %cst_4 : f32 to vector<16x128xf32>
    %9 = arith.subf %8, %3 : vector<16x128xf32>
    %10 = math.log %9 : vector<16x128xf32>
    %cst_5 = arith.constant -1.000000e+02 : f32
    %11 = vector.broadcast %cst_5 : f32 to vector<16x128xf32>
    %12 = arith.maximumf %10, %11 : vector<16x128xf32>
    %13 = arith.mulf %4, %7 : vector<16x128xf32>
    %cst_6 = arith.constant 1.000000e+00 : f32
    %14 = vector.broadcast %cst_6 : f32 to vector<16x128xf32>
    %15 = arith.subf %14, %4 : vector<16x128xf32>
    %16 = arith.mulf %15, %12 : vector<16x128xf32>
    %17 = arith.addf %13, %16 : vector<16x128xf32>
    %cst_7 = arith.constant 0.000000e+00 : f32
    %18 = vector.broadcast %cst_7 : f32 to vector<16x128xf32>
    %19 = arith.subf %18, %17 : vector<16x128xf32>
    %c0_8 = arith.constant 0 : index
    %c0_9 = arith.constant 0 : index
    %20 = vector.load %arg4[%c0_8, %c0_9] : memref<8x128xf32, #tpu.memory_space<vmem>>, vector<8x128xf32>
    %21 = vector.shape_cast %19 : vector<16x128xf32> to vector<2x8x128xf32>
    %cst_10 = arith.constant dense<0.000000e+00> : vector<8x128xf32>
    %22 = vector.multi_reduction <add>, %21, %cst_10 [0] : vector<2x8x128xf32> to vector<8x128xf32>
    %23 = arith.addf %20, %22 : vector<8x128xf32>
    %c0_11 = arith.constant 0 : index
    %c0_12 = arith.constant 0 : index
    %24 = vector.load %arg4[%c0_11, %c0_12] : memref<8x128xf32, #tpu.memory_space<vmem>>, vector<8x128xf32>
    tpu.vector_store %arg4[%c0_11, %c0_12], %23 {strides = array<i32>} : memref<8x128xf32, #tpu.memory_space<vmem>>, vector<8x128xf32>,
    return
  }
  func.func @transform_0(%arg0: i32, %arg1: i32) -> (i32, i32) {
    %c1_i32 = arith.constant 1 : i32
    %0 = arith.muli %arg0, %c1_i32 : i32
    %1 = arith.addi %0, %arg1 : i32
    %c0_i32 = arith.constant 0 : i32
    %c0_i32_0 = arith.constant 0 : i32
    return %1, %c0_i32 : i32, i32
  }
  func.func @transform_1(%arg0: i32, %arg1: i32) -> (i32, i32) {
    %c1_i32 = arith.constant 1 : i32
    %0 = arith.muli %arg0, %c1_i32 : i32
    %1 = arith.addi %0, %arg1 : i32
    %c0_i32 = arith.constant 0 : i32
    %c0_i32_0 = arith.constant 0 : i32
    return %1, %c0_i32 : i32, i32
  }
  func.func @transform_2(%arg0: i32, %arg1: i32) -> (i32, i32) {
    %c0_i32 = arith.constant 0 : i32
    %c0_i32_0 = arith.constant 0 : i32
    return %arg0, %c0_i32 : i32, i32
  }
}

</mosaic_0001>

<llo_original>
// kernel: tpu_custom_call.1
$region0: #{tpu_custom_call.1}
  #allocation0 [shape = 'u32[]', space=smem, size = 0x4, offset = 0x4, fixed_abs, tag = 'smem constant byte address 0x4 - core index']
  #allocation1 [shape = 'u32[72,128]{1,0:T(1,128)}', space=vmem, size = 0x9000, scoped, tag = 'internal scratch']
  %s0 = inlined_call_operand.hbm [shape: f32[16,128], index: 0, kind: input, shape index: {}]
  %s1 = inlined_call_operand.hbm [shape: f32[16,128], index: 1, kind: input, shape index: {}]
  %s2 = inlined_call_operand.hbm [shape: f32[8,128], index: 2, kind: output, shape index: {}]
  %s3 = sld [smem:[#allocation0]]
  $region30: #{tpu_custom_call.1} parent=0
    _
  %s5 = ssub.s32 1, %s3
  %s6 = scalar_select 0, %s5, %s3
  $region1: #{tpu_custom_call.1} parent=0
    #allocation2 [shape = 'u8[8192]{0}', space=vmem, size = 0x2000, scoped, tag = 'input window, operand 0, single buffered']
    #allocation3 [shape = 's32[1]{0}', space=sflag, size = 0x4, scoped, tag = 'scoped memory for tpu_custom_call.1']
    #allocation4 [shape = 's32[1]{0}', space=sflag, size = 0x4, scoped, tag = 'scoped memory for tpu_custom_call.1']
    #allocation5 [shape = 'u8[8192]{0}', space=vmem, size = 0x2000, scoped, tag = 'input window, operand 1, single buffered']
    #allocation6 [shape = 's32[1]{0}', space=sflag, size = 0x4, scoped, tag = 'scoped memory for tpu_custom_call.1']
    #allocation7 [shape = 'u8[4096]{0}', space=vmem, size = 0x1000, scoped, tag = 'output window, operand 0, single buffered']
    %7 = vsyncpa [#allocation3], 0
    %8 = vsyncpa [#allocation6], 0
    %9 = vsyncpa [#allocation4], 0
    // Predicated region
    $region2: #{tpu_custom_call.1} parent=1 // pred_check
      _
    $region3: #{tpu_custom_call.1} parent=1 // pred_check_branch
      %11 = sbr.rel (0) target = $region5
    $region4: #{tpu_custom_call.1} parent=1 // pred_region
      %s12 = sadd.s32 0, 0
      %s13 = smul.u32 2, %s12
      %15 = vsyncadd [#allocation3], 0
      %s16 = smul.addr %s13, 8
      %s17 = scalar_lea.hbm %s0, %s16
      %s18 = sshll.u32 %s17, 4
      %s19 = int_to_ptr.hbm [resolvable:$true] %s18
      %s20 = sshll.u32 [#allocation2], 4
      %s21 = int_to_ptr.vmem [resolvable:$true] %s20
      %26 = dma.hbm_to_vmem [thread:$0]  %s19, 256, %s21, [#allocation3], 128, 128, 8
    $region5: #{tpu_custom_call.1} parent=1 // pred_fallthru
      _
    // Predicated region
    $region6: #{tpu_custom_call.1} parent=1 // pred_check
      _
    $region7: #{tpu_custom_call.1} parent=1 // pred_check_branch
      %28 = sbr.rel (0) target = $region9
    $region8: #{tpu_custom_call.1} parent=1 // pred_region
      %s29 = sadd.s32 0, 0
      %s30 = smul.u32 2, %s29
      %32 = vsyncadd [#allocation6], 0
      %s33 = smul.addr %s30, 8
      %s34 = scalar_lea.hbm %s1, %s33
      %s35 = sshll.u32 %s34, 4
      %s36 = int_to_ptr.hbm [resolvable:$true] %s35
      %s37 = sshll.u32 [#allocation5], 4
      %s38 = int_to_ptr.vmem [resolvable:$true] %s37
      %43 = dma.hbm_to_vmem [thread:$0]  %s36, 256, %s38, [#allocation6], 128, 128, 8
    $region9: #{tpu_custom_call.1} parent=1 // pred_fallthru
      _
    // Predicated region
    $region10: #{tpu_custom_call.1} parent=1 // pred_check
      _
    $region11: #{tpu_custom_call.1} parent=1 // pred_check_branch
      %45 = sbr.rel (0) target = $region13
    $region12: #{tpu_custom_call.1} parent=1 // pred_region
      %47 = dma.done [#allocation3], 256
    $region13: #{tpu_custom_call.1} parent=1 // pred_fallthru
      _
    // Predicated region
    $region14: #{tpu_custom_call.1} parent=1 // pred_check
      _
    $region15: #{tpu_custom_call.1} parent=1 // pred_check_branch
      %49 = sbr.rel (0) target = $region17
    $region16: #{tpu_custom_call.1} parent=1 // pred_region
      %51 = dma.done [#allocation6], 256
    $region17: #{tpu_custom_call.1} parent=1 // pred_fallthru
      _
    %s52 = sadd.s32 0, 0
    %s53 = smul.u32 2, %s52
    %s54 = sadd.s32 0, 0
    %s55 = smul.u32 2, %s54
    %p56 = scmp.eq.s32.totalorder 0, 0
    // Predicated region
    $region18: #{tpu_custom_call.1} parent=1 // pred_check
      %p57 = pneg %p56
    $region19: #{tpu_custom_call.1} parent=1 // pred_check_branch
      %59 = sbr.rel (%p57) target = $region21
    $region20: #{tpu_custom_call.1} parent=1 // pred_region
      %60 = vst [vmem:[#allocation7] sm:$0xff] 0.0
    $region21: #{tpu_custom_call.1} parent=1 // pred_fallthru
      _
    %v61 = vld [vmem:[#allocation2] sm:$0xff]
    %v62 = vld [vmem:[#allocation2 + $0x8] sm:$0xff]
    %v63 = vld [vmem:[#allocation5] sm:$0xff]
    %v64 = vld [vmem:[#allocation5 + $0x8] sm:$0xff]
    %v65 = vlog2.pop %v61
    %v66 = vmul.f32 %v65, 0.6931472
    %v67 = vlog2.pop %v62
    %v68 = vmul.f32 %v67, 0.6931472
    %v69 = vmax.f32 %v66, -100.0
    %v70 = vmax.f32 %v68, -100.0
    %v71 = vsub.f32 1.0, %v61
    %v72 = vsub.f32 1.0, %v62
    %v73 = vlog2.pop %v71
    %v74 = vmul.f32 %v73, 0.6931472
    %v75 = vlog2.pop %v72
    %v76 = vmul.f32 %v75, 0.6931472
    %v77 = vmax.f32 %v74, -100.0
    %v78 = vmax.f32 %v76, -100.0
    %v79 = vmul.f32 %v63, %v69
    %v80 = vmul.f32 %v64, %v70
    %v81 = vsub.f32 1.0, %v63
    %v82 = vsub.f32 1.0, %v64
    %v83 = vmul.f32 %v81, %v77
    %v84 = vmul.f32 %v82, %v78
    %v85 = vadd.f32 %v79, %v83
    %v86 = vadd.f32 %v80, %v84
    %v87 = vsub.f32 0.0, %v85
    %v88 = vsub.f32 0.0, %v86
    %v89 = vld [vmem:[#allocation7] sm:$0xff]
    %v90 = vadd.f32 %v87, %v88
    %v91 = vadd.f32 %v89, %v90
    %92 = vst [vmem:[#allocation7] sm:$0xff] %v91
    // Predicated region
    $region22: #{tpu_custom_call.1} parent=1 // pred_check
      _
    $region23: #{tpu_custom_call.1} parent=1 // pred_check_branch
      %94 = sbr.rel (0) target = $region25
    $region24: #{tpu_custom_call.1} parent=1 // pred_region
      %96 = vsyncadd [#allocation4], 0
      %s98 = sshll.u32 [#allocation7], 4
      %s99 = int_to_ptr.vmem [resolvable:$true] %s98
      %s100 = sshll.u32 %s2, 4
      %s101 = int_to_ptr.hbm [resolvable:$true] %s100
      %103 = dma.vmem_to_hbm [thread:$0]  %s99, 128, %s101, [#allocation4]
    $region25: #{tpu_custom_call.1} parent=1 // pred_fallthru
      _
    // Predicated region
    $region26: #{tpu_custom_call.1} parent=1 // pred_check
      _
    $region27: #{tpu_custom_call.1} parent=1 // pred_check_branch
      %105 = sbr.rel (0) target = $region29
    $region28: #{tpu_custom_call.1} parent=1 // pred_region
      %107 = dma.done [#allocation4], 128
    $region29: #{tpu_custom_call.1} parent=1 // pred_fallthru
      _
    %108 = vsyncpa [#allocation3], 1
    %109 = vsyncpa [#allocation6], 1
    %110 = vsyncpa [#allocation4], 1

</llo_original>
